<compile_context>
chip_gen: v7x
topology: tpu7x:2x2x1
jax: 0.10.0
libtpu: 0.0.40
codegen_flags: <defaults>
</compile_context>

<pallas_src>
import functools

import jax
import jax.numpy as jnp
from jax import lax
from jax.experimental import pallas as pl
from jax.experimental.pallas import tpu as pltpu


# --------------------------------------------------------------------------------------
# Stage 1: global average pool.  Inputs: n_block refs of (TR, HW); output (TR, n_block).
# --------------------------------------------------------------------------------------
def _pool_kernel(*refs):
    x_refs = refs[:-1]
    o_ref = refs[-1]
    for i, xr in enumerate(x_refs):
        x = xr[...].astype(jnp.float32)
        o_ref[:, i:i + 1] = jnp.mean(x, axis=-1, keepdims=True)  # mean over H*W lanes


# --------------------------------------------------------------------------------------
# Stage 2: per-block LayerNorm -> MLP -> sigmoid, then softmax across blocks.
#   pooled: (n_block, N, C); ln_g/ln_b/b2: (n_block, 1, C)
#   w1: (n_block, mid, C)  (PyTorch Linear layout, out x in)
#   w2: (n_block, C, mid)
#   attn out: (n_block, N, C)
# --------------------------------------------------------------------------------------
def _gate_kernel(n_block, pooled_ref, g_ref, b_ref, w1_ref, w2_ref, b2_ref, attn_ref):
    eps = jnp.float32(1e-5)
    logits = []
    for i in range(n_block):
        f = pooled_ref[i]                                             # (N, C)
        mu = jnp.mean(f, axis=-1, keepdims=True)
        var = jnp.mean(jnp.square(f - mu), axis=-1, keepdims=True)    # biased, like nn.LayerNorm
        fn = (f - mu) * lax.rsqrt(var + eps) * g_ref[i] + b_ref[i]    # (N, C)

        w1 = w1_ref[i]                                                # (mid, C)
        h = jnp.sum(fn[:, None, :] * w1[None, :, :], axis=-1)         # (N, mid)
        h = jnp.maximum(h, 0.0)                                       # ReLU

        w2 = w2_ref[i]                                                # (C, mid)
        v = jnp.sum(h[:, None, :] * w2[None, :, :], axis=-1) + b2_ref[i]   # (N, C)
        logits.append(jax.nn.sigmoid(v))

    # softmax over the block axis, written per-block (avoids in-kernel stack/axis-0 reduce)
    m = logits[0]
    for v in logits[1:]:
        m = jnp.maximum(m, v)
    exps = [jnp.exp(v - m) for v in logits]
    den = exps[0]
    for e in exps[1:]:
        den = den + e
    inv = 1.0 / den
    for i, e in enumerate(exps):
        attn_ref[i] = e * inv


# --------------------------------------------------------------------------------------
# Stage 3: weighted sum of blocks (the heavy streaming pass).
#   a: (TR, n_block) softmax weights per (batch, channel) row; x_i: (TR, HW); out: (TR, HW)
# --------------------------------------------------------------------------------------
def _combine_kernel(n_block, a_ref, *refs):
    x_refs = refs[:n_block]
    o_ref = refs[n_block]
    a = a_ref[...]                                                    # (TR, n_block) f32
    acc = x_refs[0][...].astype(jnp.float32) * a[:, 0:1]
    for i in range(1, n_block):
        acc = acc + x_refs[i][...].astype(jnp.float32) * a[:, i:i + 1]
    o_ref[...] = (acc * (1.0 / n_block)).astype(o_ref.dtype)


# --------------------------------------------------------------------------------------
# Wrapper
# --------------------------------------------------------------------------------------
def stage_channel_attention(xs, ln_gamma, ln_beta, w1, w2, b2,
                            *, vmem_limit_bytes=64 * 1024 * 1024):
    """xs: tuple of n_block arrays, each (N, C, H, W).
    ln_gamma, ln_beta, b2: (n_block, C); w1: (n_block, mid, C); w2: (n_block, C, mid)."""
    n_block = len(xs)
    N, C, H, W = xs[0].shape
    HW = H * W
    NC = N * C
    mid = w1.shape[1]
    out_dtype = xs[0].dtype

    # Free, contiguous reshape only (no HBM transposes): NCHW -> (N*C, H*W), lanes = H*W.
    xs_flat = [x.reshape(NC, HW) for x in xs]

    # Row tile: multiples of 8 rows, ~8 MiB per-step footprint cap (input+output tiles,
    # double-buffered) so it fits v7x's 64 MiB VMEM with default pipelining.
    itemsize = jnp.dtype(out_dtype).itemsize
    budget = 8 * 1024 * 1024
    per_row = HW * itemsize * (n_block + 1) * 2
    tr = max(8, (budget // per_row) // 8 * 8)
    if tr >= NC or HW % 128 != 0:
        tr = NC                      # full rows: block shape == full array dims
    grid_rows = pl.cdiv(NC, tr)

    stream_params = pltpu.CompilerParams(
        dimension_semantics=("parallel",),
        vmem_limit_bytes=vmem_limit_bytes,
    )

    # ---- Stage 1: global average pool over H*W for every (batch, channel) row --------
    pooled = pl.pallas_call(
        _pool_kernel,
        out_shape=jax.ShapeDtypeStruct((NC, n_block), jnp.float32),
        grid=(grid_rows,),
        in_specs=[pl.BlockSpec((tr, HW), lambda r: (r, 0)) for _ in range(n_block)],
        out_specs=pl.BlockSpec((tr, n_block), lambda r: (r, 0)),
        compiler_params=stream_params,
    )(*xs_flat)

    # Tiny (n_block*N*C element) relayout between stages — negligible HBM traffic.
    pooled_bnc = jnp.transpose(pooled.reshape(N, C, n_block), (2, 0, 1))   # (n_block, N, C)

    # ---- Stage 2: gate MLP + softmax across blocks ------------------------------------
    g3 = ln_gamma.astype(jnp.float32).reshape(n_block, 1, C)
    b3 = ln_beta.astype(jnp.float32).reshape(n_block, 1, C)
    bias3 = b2.astype(jnp.float32).reshape(n_block, 1, C)
    w1f = w1.astype(jnp.float32)
    w2f = w2.astype(jnp.float32)

    def full_spec(shape):
        return pl.BlockSpec(shape, lambda i, _s=shape: (0,) * len(_s))

    attn = pl.pallas_call(
        functools.partial(_gate_kernel, n_block),
        out_shape=jax.ShapeDtypeStruct((n_block, N, C), jnp.float32),
        grid=(1,),
        in_specs=[
            full_spec((n_block, N, C)),      # pooled
            full_spec((n_block, 1, C)),      # LayerNorm gamma
            full_spec((n_block, 1, C)),      # LayerNorm beta
            full_spec((n_block, mid, C)),    # Linear1 weight (out, in)
            full_spec((n_block, C, mid)),    # Linear2 weight (out, in)
            full_spec((n_block, 1, C)),      # Linear2 bias
        ],
        out_specs=full_spec((n_block, N, C)),
        compiler_params=pltpu.CompilerParams(dimension_semantics=("arbitrary",)),
    )(pooled_bnc, g3, b3, w1f, w2f, bias3)

    # Tiny relayout: (n_block, N, C) -> (N*C, n_block), rows match xs_flat rows.
    attn_flat = jnp.transpose(attn, (1, 2, 0)).reshape(NC, n_block)

    # ---- Stage 3: weighted combine of the blocks --------------------------------------
    out_flat = pl.pallas_call(
        functools.partial(_combine_kernel, n_block),
        out_shape=jax.ShapeDtypeStruct((NC, HW), out_dtype),
        grid=(grid_rows,),
        in_specs=[pl.BlockSpec((tr, n_block), lambda r: (r, 0))]
                 + [pl.BlockSpec((tr, HW), lambda r: (r, 0)) for _ in range(n_block)],
        out_specs=pl.BlockSpec((tr, HW), lambda r: (r, 0)),
        compiler_params=stream_params,
    )(attn_flat, *xs_flat)

    return out_flat.reshape(N, C, H, W)


# --------------------------------------------------------------------------------------
# Pure-JAX reference of the PyTorch forward
# --------------------------------------------------------------------------------------
def _reference(xs, ln_gamma, ln_beta, w1, w2, b2):
    n_block = len(xs)
    vecs = []
    for i, xi in enumerate(xs):
        g = jnp.mean(xi, axis=(2, 3))                                       # (N, C)
        mu = jnp.mean(g, axis=-1, keepdims=True)
        var = jnp.mean(jnp.square(g - mu), axis=-1, keepdims=True)
        gn = (g - mu) / jnp.sqrt(var + 1e-5) * ln_gamma[i] + ln_beta[i]
        h = jnp.maximum(gn @ w1[i].T, 0.0)                                  # (N, mid)
        v = jax.nn.sigmoid(h @ w2[i].T + b2[i])                             # (N, C)
        vecs.append(v)
    att = jax.nn.softmax(jnp.stack(vecs, axis=1), axis=1)                   # (N, n_block, C)
    out = 0.0
    for i, xi in enumerate(xs):
        out = out + xi * att[:, i][:, :, None, None]
    return out / n_block


if __name__ == "__main__":
    key = jax.random.PRNGKey(0)
    ks = jax.random.split(key, 8)

    N, C, H, W = 2, 4, 16, 16
    n_block = 2
    reduction, min_unit = 4, 16
    mid = max(C // reduction, min_unit)   # = 16, matching the module __init__

    xs = tuple(jax.random.normal(ks[i], (N, C, H, W), dtype=jnp.float32)
               for i in range(n_block))

    # Deterministic synthetic parameters (LayerNorm affine + two Linears per block).
    ln_gamma = 1.0 + 0.1 * jax.random.normal(ks[2], (n_block, C), dtype=jnp.float32)
    ln_beta = 0.1 * jax.random.normal(ks[3], (n_block, C), dtype=jnp.float32)
    w1 = 0.5 * jax.random.normal(ks[4], (n_block, mid, C), dtype=jnp.float32)
    w2 = 0.5 * jax.random.normal(ks[5], (n_block, C, mid), dtype=jnp.float32)
    b2 = 0.1 * jax.random.normal(ks[6], (n_block, C), dtype=jnp.float32)

    out = stage_channel_attention(xs, ln_gamma, ln_beta, w1, w2, b2)
    out = jax.block_until_ready(out)

    ref = _reference(xs, ln_gamma, ln_beta, w1, w2, b2)
    assert out.shape == (N, C, H, W)
    assert jnp.allclose(out, ref, atol=1e-5, rtol=1e-5), "mismatch vs reference"

    print("KERNEL_OK")
</pallas_src>

<mosaic_0001>
module attributes {stable_mosaic.version = 11 : i64} {
  func.func @_pool_kernel(%arg0: i32, %arg1: memref<8x256xf32, #tpu.memory_space<vmem>>, %arg2: memref<8x256xf32, #tpu.memory_space<vmem>>, %arg3: memref<8x2xf32, #tpu.memory_space<vmem>>) attributes {dimension_semantics = [#tpu.dimension_semantics<parallel>], iteration_bounds = array<i64: 1>, scalar_prefetch = 0 : i64, scratch_operands = 0 : i64, tpu.core_type = #tpu.core_type<tc>, window_params = [{transform_indices = @transform_0, window_bounds = array<i64: 8, 256>}, {transform_indices = @transform_1, window_bounds = array<i64: 8, 256>}, {transform_indices = @transform_2, window_bounds = array<i64: 8, 2>}]} {
    %c0 = arith.constant 0 : index
    %c0_0 = arith.constant 0 : index
    %0 = vector.load %arg1[%c0, %c0_0] : memref<8x256xf32, #tpu.memory_space<vmem>>, vector<8x256xf32>
    %cst = arith.constant dense<0.000000e+00> : vector<8xf32>
    %1 = vector.multi_reduction <add>, %0, %cst [1] : vector<8x256xf32> to vector<8xf32>
    %2 = vector.shape_cast %1 : vector<8xf32> to vector<8x1xf32>
    %cst_1 = arith.constant 2.560000e+02 : f32
    %3 = vector.broadcast %cst_1 : f32 to vector<8x1xf32>
    %4 = arith.divf %2, %3 : vector<8x1xf32>
    %c0_2 = arith.constant 0 : index
    %c0_3 = arith.constant 0 : index
    %5 = vector.load %arg3[%c0_2, %c0_3] : memref<8x2xf32, #tpu.memory_space<vmem>>, vector<8x1xf32>
    tpu.vector_store %arg3[%c0_2, %c0_3], %4 {strides = array<i32>} : memref<8x2xf32, #tpu.memory_space<vmem>>, vector<8x1xf32>,
    %c0_4 = arith.constant 0 : index
    %c0_5 = arith.constant 0 : index
    %6 = vector.load %arg2[%c0_4, %c0_5] : memref<8x256xf32, #tpu.memory_space<vmem>>, vector<8x256xf32>
    %cst_6 = arith.constant dense<0.000000e+00> : vector<8xf32>
    %7 = vector.multi_reduction <add>, %6, %cst_6 [1] : vector<8x256xf32> to vector<8xf32>
    %8 = vector.shape_cast %7 : vector<8xf32> to vector<8x1xf32>
    %cst_7 = arith.constant 2.560000e+02 : f32
    %9 = vector.broadcast %cst_7 : f32 to vector<8x1xf32>
    %10 = arith.divf %8, %9 : vector<8x1xf32>
    %c0_8 = arith.constant 0 : index
    %c1 = arith.constant 1 : index
    %11 = vector.load %arg3[%c0_8, %c1] : memref<8x2xf32, #tpu.memory_space<vmem>>, vector<8x1xf32>
    tpu.vector_store %arg3[%c0_8, %c1], %10 {strides = array<i32>} : memref<8x2xf32, #tpu.memory_space<vmem>>, vector<8x1xf32>,
    return
  }
  func.func @transform_0(%arg0: i32) -> (i32, i32) {
    %c0_i32 = arith.constant 0 : i32
    %c0_i32_0 = arith.constant 0 : i32
    return %arg0, %c0_i32 : i32, i32
  }
  func.func @transform_1(%arg0: i32) -> (i32, i32) {
    %c0_i32 = arith.constant 0 : i32
    %c0_i32_0 = arith.constant 0 : i32
    return %arg0, %c0_i32 : i32, i32
  }
  func.func @transform_2(%arg0: i32) -> (i32, i32) {
    %c0_i32 = arith.constant 0 : i32
    %c0_i32_0 = arith.constant 0 : i32
    return %arg0, %c0_i32 : i32, i32
  }
}

</mosaic_0001>

<llo_original>
// kernel: tpu_custom_call.1
$region0: #{tpu_custom_call.1}
  #allocation0 [shape = 'u32[]', space=smem, size = 0x4, offset = 0x4, fixed_abs, tag = 'smem constant byte address 0x4 - core index']
  #allocation1 [shape = 'u32[144,128]{1,0:T(1,128)}', space=vmem, size = 0x12000, scoped, tag = 'internal scratch']
  %s0 = inlined_call_operand.hbm [shape: f32[8,256], index: 0, kind: input, shape index: {}]
  %s1 = inlined_call_operand.hbm [shape: f32[8,256], index: 1, kind: input, shape index: {}]
  %s2 = inlined_call_operand.hbm [shape: f32[8,2], index: 2, kind: output, shape index: {}]
  %s3 = sld [smem:[#allocation0]]
  $region26: #{tpu_custom_call.1} parent=0
    _
  %s5 = ssub.s32 1, %s3
  %s6 = scalar_select 0, %s5, %s3
  $region1: #{tpu_custom_call.1} parent=0
    #allocation2 [shape = 'u8[8192]{0}', space=vmem, size = 0x2000, scoped, tag = 'input window, operand 0, single buffered']
    #allocation3 [shape = 's32[1]{0}', space=sflag, size = 0x4, scoped, tag = 'scoped memory for tpu_custom_call.1']
    #allocation4 [shape = 's32[1]{0}', space=sflag, size = 0x4, scoped, tag = 'scoped memory for tpu_custom_call.1']
    #allocation5 [shape = 'u8[8192]{0}', space=vmem, size = 0x2000, scoped, tag = 'input window, operand 1, single buffered']
    #allocation6 [shape = 's32[1]{0}', space=sflag, size = 0x4, scoped, tag = 'scoped memory for tpu_custom_call.1']
    #allocation7 [shape = 'u8[4096]{0}', space=vmem, size = 0x1000, scoped, tag = 'output window, operand 0, single buffered']
    %7 = vsyncpa [#allocation3], 0
    %8 = vsyncpa [#allocation6], 0
    %9 = vsyncpa [#allocation4], 0
    // Predicated region
    $region2: #{tpu_custom_call.1} parent=1 // pred_check
      _
    $region3: #{tpu_custom_call.1} parent=1 // pred_check_branch
      %11 = sbr.rel (0) target = $region5
    $region4: #{tpu_custom_call.1} parent=1 // pred_region
      %s13 = ssub.s32 256, 256
      %14 = vsyncadd [#allocation3], %s13
      %s16 = sshll.u32 [#allocation2], 4
      %s17 = int_to_ptr.vmem [resolvable:$true] %s16
      %19 = dma.hbm_to_vmem [thread:$0]  %s0, 256, %s17, [#allocation3]
    $region5: #{tpu_custom_call.1} parent=1 // pred_fallthru
      _
    // Predicated region
    $region6: #{tpu_custom_call.1} parent=1 // pred_check
      _
    $region7: #{tpu_custom_call.1} parent=1 // pred_check_branch
      %21 = sbr.rel (0) target = $region9
    $region8: #{tpu_custom_call.1} parent=1 // pred_region
      %s23 = ssub.s32 256, 256
      %24 = vsyncadd [#allocation6], %s23
      %s26 = sshll.u32 [#allocation5], 4
      %s27 = int_to_ptr.vmem [resolvable:$true] %s26
      %29 = dma.hbm_to_vmem [thread:$0]  %s1, 256, %s27, [#allocation6]
    $region9: #{tpu_custom_call.1} parent=1 // pred_fallthru
      _
    // Predicated region
    $region10: #{tpu_custom_call.1} parent=1 // pred_check
      _
    $region11: #{tpu_custom_call.1} parent=1 // pred_check_branch
      %31 = sbr.rel (0) target = $region13
    $region12: #{tpu_custom_call.1} parent=1 // pred_region
      %32 = dma.done [#allocation3], 256
    $region13: #{tpu_custom_call.1} parent=1 // pred_fallthru
      _
    // Predicated region
    $region14: #{tpu_custom_call.1} parent=1 // pred_check
      _
    $region15: #{tpu_custom_call.1} parent=1 // pred_check_branch
      %34 = sbr.rel (0) target = $region17
    $region16: #{tpu_custom_call.1} parent=1 // pred_region
      %35 = dma.done [#allocation6], 256
    $region17: #{tpu_custom_call.1} parent=1 // pred_fallthru
      _
    %v36 = vld [vmem:[#allocation2] sm:$0xff]
    %v37 = vld [vmem:[#allocation2 + $0x8] sm:$0xff]
    %v38 = vadd.f32 %v36, %v37
    %39 = vadd.xlane.f32.xlu0 %v38
    %v40 = vpop.xlane.xlu0 %39
    %v41 = vrcp.pop 256.0
    %v42 = vmul.f32 %v40, %v41
    %vm43 = vcmask 7168
    %44 = vst.msk [vmem:[#allocation7] sm:$0xff] %vm43, %v42
    %v45 = vld [vmem:[#allocation5] sm:$0xff]
    %v46 = vld [vmem:[#allocation5 + $0x8] sm:$0xff]
    %v47 = vadd.f32 %v45, %v46
    %48 = vadd.xlane.f32.xlu0 %v47
    %v49 = vpop.xlane.xlu0 %48
    %v50 = vmul.f32 %v49, %v41
    %vm51 = vcmask 15368
    %52 = vst.msk [vmem:[#allocation7] sm:$0xff] %vm51, %v50
    // Predicated region
    $region18: #{tpu_custom_call.1} parent=1 // pred_check
      _
    $region19: #{tpu_custom_call.1} parent=1 // pred_check_branch
      %54 = sbr.rel (0) target = $region21
    $region20: #{tpu_custom_call.1} parent=1 // pred_region
      %s56 = ssub.s32 128, 128
      %57 = vsyncadd [#allocation4], %s56
      %s59 = sshll.u32 [#allocation7], 4
      %s60 = int_to_ptr.vmem [resolvable:$true] %s59
      %62 = dma.vmem_to_hbm [thread:$0]  %s60, 128, %s2, [#allocation4]
    $region21: #{tpu_custom_call.1} parent=1 // pred_fallthru
      _
    // Predicated region
    $region22: #{tpu_custom_call.1} parent=1 // pred_check
      _
    $region23: #{tpu_custom_call.1} parent=1 // pred_check_branch
      %64 = sbr.rel (0) target = $region25
    $region24: #{tpu_custom_call.1} parent=1 // pred_region
      %65 = dma.done [#allocation4], 128
    $region25: #{tpu_custom_call.1} parent=1 // pred_fallthru
      _
    %66 = vsyncpa [#allocation3], 1
    %67 = vsyncpa [#allocation6], 1
    %68 = vsyncpa [#allocation4], 1

</llo_original>
